<compile_context>
chip_gen: v5e
topology: v5e:2x2
jax: 0.10.0
libtpu: 0.0.40
codegen_flags: <defaults>
</compile_context>

<pallas_src>
import functools

import jax
import jax.numpy as jnp
from jax.experimental import pallas as pl
from jax.experimental.pallas import tpu as pltpu

LANE = 128
SUBLANE = 8


def _round_up(x, m):
    return ((x + m - 1) // m) * m


def _gru_classifier_kernel(C,                 # static: true number of classes
                           lens_smem,         # (Bp,)     int32  SMEM (scalar prefetch)
                           lens_ref,          # (Btile,1) int32  VMEM (per-row mask)
                           x_ref,             # (TG*Btile, E)  bf16  time-major chunk
                           wih_ref,           # (E, 3*Hg)      bf16
                           whh_ref,           # (Hg, 3*Hg)     bf16
                           gib_ref,           # (1, 3*Hg)      f32  b_ih + b_hh[r,z]
                           bhn_ref,           # (1, Hg)        f32  b_hh[n]
                           wout_ref,          # (Hg, Cp)       bf16
                           bout_ref,          # (1, Cp)        f32
                           h_out_ref,         # (Btile, Hg)    f32  out
                           logp_ref,          # (Btile, Cp)    f32  out
                           gi_ref,            # scratch (TG*Btile, 3*Hg) bf16
                           h_ref):            # scratch (Btile, Hg)      f32
    b = pl.program_id(0)
    tc = pl.program_id(1)
    n_tc = pl.num_programs(1)

    Btile, Hg = h_ref.shape
    TG = gi_ref.shape[0] // Btile

    chunk_start = tc * TG
    # batch is sorted by length (descending): this tile's longest sequence
    # bounds the recurrence for the whole tile.
    t_max = lens_smem[b * Btile]

    @pl.when(tc == 0)
    def _():
        h_ref[...] = jnp.zeros_like(h_ref)

    @pl.when(chunk_start < t_max)
    def _():
        # ---- per-chunk input projection (bf16 MXU, f32 accumulation) -------
        # b_ih and the r/z parts of b_hh are pre-folded into gib.
        gi_ref[...] = (jnp.dot(x_ref[...], wih_ref[...],
                               preferred_element_type=jnp.float32)
                       + gib_ref[...]).astype(jnp.bfloat16)

        # hoisted out of the loop: JAX does not CSE broadcast_in_dim per-iter.
        bhn = jnp.broadcast_to(bhn_ref[...], (Btile, Hg)).astype(jnp.float32)
        lens_col = lens_ref[...]                          # (Btile, 1) int32

        n_steps = jnp.minimum(TG, t_max - chunk_start)

        @pl.loop(0, n_steps)
        def _(s):
            h = h_ref[...]                                # (Btile, Hg) f32
            row = pl.multiple_of(s * Btile, Btile)
            gi = gi_ref[pl.ds(row, Btile), :].astype(jnp.float32)
            gh = jnp.dot(h.astype(jnp.bfloat16), whh_ref[...],
                         preferred_element_type=jnp.float32)
            # each gate slab is lane-aligned (width Hg) -> free slices
            i_r, i_z, i_n = gi[:, :Hg], gi[:, Hg:2 * Hg], gi[:, 2 * Hg:]
            h_r, h_z, h_n = gh[:, :Hg], gh[:, Hg:2 * Hg], gh[:, 2 * Hg:]
            # sigmoid(x) = 0.5 + 0.5*tanh(0.5*x): one EUP op per gate
            r = 0.5 + 0.5 * jnp.tanh(0.5 * (i_r + h_r))
            z = 0.5 + 0.5 * jnp.tanh(0.5 * (i_z + h_z))
            n = jnp.tanh(i_n + r * (h_n + bhn))
            h_new = (1.0 - z) * n + z * h
            # pack_padded_sequence semantics: rows whose length is exhausted
            # keep their last valid hidden state.
            active = (chunk_start + s) < lens_col         # (Btile, 1) bool
            h_ref[...] = jnp.where(active, h_new, h)

    # ---- classifier head + log-softmax at the final time chunk -------------
    @pl.when(tc == n_tc - 1)
    def _():
        hf = h_ref[...]
        h_out_ref[...] = hf
        logits = (jnp.dot(hf.astype(jnp.bfloat16), wout_ref[...],
                          preferred_element_type=jnp.float32)
                  + bout_ref[...])
        col = jax.lax.broadcasted_iota(jnp.int32, logits.shape, 1)
        logits = jnp.where(col < C, logits, jnp.float32(-1e30))
        m = jnp.max(logits, axis=1, keepdims=True)
        lse = jnp.log(jnp.sum(jnp.exp(logits - m), axis=1, keepdims=True)) + m
        logp_ref[...] = logits - lse


def gru_classifier_forward(sentence, sent_len, params, *,
                           time_chunk=None, batch_tile=None):
    """sentence: (B, T) int32 token ids, sent_len: (B,) int32 lengths."""
    emb = params["embedding"]                      # (V, E)
    B, T = sentence.shape
    E = emb.shape[1]
    H = params["w_hh"].shape[0]
    C = params["w_out"].shape[1]

    Hg = _round_up(H, LANE)          # lane-aligned per-gate width
    Cp = _round_up(C, LANE)          # lane-aligned class width
    # TODO(synk): for small H (<64) the per-gate Hg slabs are mostly zero
    # padding; production H should be a multiple of 128 so Hg == H.

    # batch tile: sublane-aligned, <=64 rows so the f32 loop body stays in vregs
    if batch_tile is None:
        batch_tile = 64
    Btile = _round_up(min(batch_tile, _round_up(B, SUBLANE)), SUBLANE)
    Bp = _round_up(B, Btile)
    n_btiles = Bp // Btile

    # time chunk: bounds VMEM at O(TG) and restores software pipelining
    if time_chunk is None:
        time_chunk = 32
    TG = max(1, min(time_chunk, T))
    Tp = _round_up(T, TG)
    n_tchunks = Tp // TG

    # ---- plain-JAX glue: embedding gather + descending length sort ---------
    embeds = jnp.take(emb, sentence, axis=0).astype(jnp.float32)   # (B, T, E)
    # NOTE: stable sort; torch's descending sort is not guaranteed stable, so
    # rows with tied lengths may be ordered differently (per-row values exact).
    order = jnp.argsort(-sent_len, stable=True)
    lens_sorted = sent_len[order].astype(jnp.int32)
    embeds_sorted = embeds[order]

    # pad batch/time (padded rows: length 0, zero embeddings -> hidden stays 0)
    lens_p = jnp.pad(lens_sorted, (0, Bp - B))
    x_p = jnp.pad(embeds_sorted, ((0, Bp - B), (0, Tp - T), (0, 0)))
    # layout: row = btile*(Tp*Btile) + t*Btile + j  -> rectangular chunks
    x_tiles = x_p.reshape(n_btiles, Btile, Tp, E).transpose(0, 2, 1, 3)
    x_flat = x_tiles.reshape(n_btiles * Tp * Btile, E).astype(jnp.bfloat16)

    # ---- lane-align weights: each GRU gate gets its own Hg-wide slab --------
    def pad_gate_cols(w):            # (rows, 3*H) -> (rows, 3*Hg), zero-padded
        rows = w.shape[0]
        w3 = w.reshape(rows, 3, H)
        return jnp.pad(w3, ((0, 0), (0, 0), (0, Hg - H))).reshape(rows, 3 * Hg)

    wih_p = pad_gate_cols(params["w_ih"]).astype(jnp.bfloat16)          # (E, 3*Hg)
    whh_p = jnp.pad(pad_gate_cols(params["w_hh"]),
                    ((0, Hg - H), (0, 0))).astype(jnp.bfloat16)         # (Hg, 3*Hg)
    b_ih = params["b_ih"].reshape(3, H)
    b_hh = params["b_hh"].reshape(3, H)
    # fold b_ih (all gates) + b_hh (r, z) into the hoisted input projection;
    # only b_hh[n] must stay inside r*(...) in the loop.
    gib = jnp.stack([b_ih[0] + b_hh[0], b_ih[1] + b_hh[1], b_ih[2]], axis=0)
    gib_p = jnp.pad(gib, ((0, 0), (0, Hg - H))).reshape(1, 3 * Hg).astype(jnp.float32)
    bhn_p = jnp.pad(b_hh[2], (0, Hg - H)).reshape(1, Hg).astype(jnp.float32)
    wout_p = jnp.pad(params["w_out"],
                     ((0, Hg - H), (0, Cp - C))).astype(jnp.bfloat16)   # (Hg, Cp)
    bout_p = jnp.pad(params["b_out"].reshape(1, C),
                     ((0, 0), (0, Cp - C))).astype(jnp.float32)         # (1, Cp)

    kernel = functools.partial(_gru_classifier_kernel, C)

    grid_spec = pltpu.PrefetchScalarGridSpec(
        num_scalar_prefetch=1,               # sorted lens -> SMEM (loop bounds)
        grid=(n_btiles, n_tchunks),
        in_specs=[
            pl.BlockSpec((Btile, 1), lambda b, t, lens: (b, 0)),         # lens (VMEM)
            pl.BlockSpec((TG * Btile, E),
                         lambda b, t, lens: (b * n_tchunks + t, 0)),     # x chunk
            pl.BlockSpec((E, 3 * Hg), lambda b, t, lens: (0, 0)),        # W_ih^T
            pl.BlockSpec((Hg, 3 * Hg), lambda b, t, lens: (0, 0)),       # W_hh^T
            pl.BlockSpec((1, 3 * Hg), lambda b, t, lens: (0, 0)),        # folded bias
            pl.BlockSpec((1, Hg), lambda b, t, lens: (0, 0)),            # b_hh[n]
            pl.BlockSpec((Hg, Cp), lambda b, t, lens: (0, 0)),           # W_out^T
            pl.BlockSpec((1, Cp), lambda b, t, lens: (0, 0)),            # b_out
        ],
        out_specs=[
            pl.BlockSpec((Btile, Hg), lambda b, t, lens: (b, 0)),        # final hidden
            pl.BlockSpec((Btile, Cp), lambda b, t, lens: (b, 0)),        # log-softmax
        ],
        scratch_shapes=[
            pltpu.VMEM((TG * Btile, 3 * Hg), jnp.bfloat16),   # per-chunk gi (bf16)
            pltpu.VMEM((Btile, Hg), jnp.float32),             # hidden state carry
        ],
    )

    # explicit VMEM budget (bytes), with margin, clamped for v7x's 64 MiB VMEM
    vmem_est = (
        2 * (TG * Btile * E * 2)                              # x chunk, 2 buffers
        + TG * Btile * 3 * Hg * 2                             # gi scratch (bf16)
        + 2 * ((E + Hg + 1) * 3 * Hg * 2 + (Hg + 1) * Cp * 2  # weights (bf16)
               + (3 * Hg + Hg + Cp) * 4)                      # biases (f32)
        + 2 * Btile * (Hg + Cp) * 4                           # outputs
        + Btile * Hg * 4 + Bp * 8                             # h scratch, lens
    )
    vmem_limit = int(min(max(2 * vmem_est, 16 << 20), 48 << 20))

    h_pad, logp_pad = pl.pallas_call(
        kernel,
        grid_spec=grid_spec,
        out_shape=(
            jax.ShapeDtypeStruct((Bp, Hg), jnp.float32),
            jax.ShapeDtypeStruct((Bp, Cp), jnp.float32),
        ),
        compiler_params=pltpu.CompilerParams(
            dimension_semantics=("parallel", "arbitrary"),   # batch tiles // on v7x
            vmem_limit_bytes=vmem_limit),
    )(lens_p, lens_p.reshape(Bp, 1), x_flat, wih_p, whh_p, gib_p, bhn_p,
      wout_p, bout_p)

    # NOTE: to match the PyTorch module, both outputs stay in the
    # length-sorted (descending) order — the module never unsorts hidden[-1].
    return logp_pad[:B, :C], h_pad[:B, :H]


def init_params(key, vocab_size, embedding_dim, hidden_dim, output_classes):
    ks = jax.random.split(key, 7)
    s = 1.0 / jnp.sqrt(hidden_dim)
    return {
        "embedding": jax.random.normal(ks[0], (vocab_size, embedding_dim),
                                       jnp.float32) * 0.1,
        # stored transposed relative to torch: (input, 3*hidden), gate order r,z,n
        "w_ih": jax.random.uniform(ks[1], (embedding_dim, 3 * hidden_dim),
                                   jnp.float32, -s, s),
        "w_hh": jax.random.uniform(ks[2], (hidden_dim, 3 * hidden_dim),
                                   jnp.float32, -s, s),
        "b_ih": jax.random.uniform(ks[3], (3 * hidden_dim,), jnp.float32, -s, s),
        "b_hh": jax.random.uniform(ks[4], (3 * hidden_dim,), jnp.float32, -s, s),
        "w_out": jax.random.uniform(ks[5], (hidden_dim, output_classes),
                                    jnp.float32, -s, s),
        "b_out": jax.random.uniform(ks[6], (output_classes,), jnp.float32, -s, s),
    }


if __name__ == "__main__":
    B, T = 4, 8
    EMBED_DIM, HIDDEN_DIM = 16, 32
    VOCAB, CLASSES = 50, 3

    key = jax.random.PRNGKey(0)
    k_param, k_tok, k_len = jax.random.split(key, 3)

    params = init_params(k_param, VOCAB, EMBED_DIM, HIDDEN_DIM, CLASSES)

    sentence = jax.random.randint(k_tok, (B, T), 0, VOCAB, dtype=jnp.int32)
    sent_len = jax.random.randint(k_len, (B,), 2, T + 1, dtype=jnp.int32)

    # time_chunk=4 -> two time chunks, exercising the streamed-x pipeline
    log_scores, hidden = gru_classifier_forward(sentence, sent_len, params,
                                                time_chunk=4)
    jax.block_until_ready((log_scores, hidden))

    assert log_scores.shape == (B, CLASSES)
    assert hidden.shape == (B, HIDDEN_DIM)
    assert bool(jnp.all(jnp.isfinite(log_scores)))
    assert bool(jnp.all(jnp.isfinite(hidden)))
    print("KERNEL_OK")
</pallas_src>

<mosaic_0001>
module attributes {stable_mosaic.version = 11 : i64} {
  func.func @_gru_classifier_kernel(%arg0: i32, %arg1: i32, %arg2: memref<8xi32, #tpu.memory_space<smem>>, %arg3: memref<8x1xi32, #tpu.memory_space<vmem>>, %arg4: memref<32x16xbf16, #tpu.memory_space<vmem>>, %arg5: memref<16x384xbf16, #tpu.memory_space<vmem>>, %arg6: memref<128x384xbf16, #tpu.memory_space<vmem>>, %arg7: memref<1x384xf32, #tpu.memory_space<vmem>>, %arg8: memref<1x128xf32, #tpu.memory_space<vmem>>, %arg9: memref<128x128xbf16, #tpu.memory_space<vmem>>, %arg10: memref<1x128xf32, #tpu.memory_space<vmem>>, %arg11: memref<8x128xf32, #tpu.memory_space<vmem>>, %arg12: memref<8x128xf32, #tpu.memory_space<vmem>>, %arg13: memref<32x384xbf16, #tpu.memory_space<vmem>>, %arg14: memref<8x128xf32, #tpu.memory_space<vmem>>) attributes {dimension_semantics = [#tpu.dimension_semantics<parallel>, #tpu.dimension_semantics<arbitrary>], iteration_bounds = array<i64: 1, 2>, scalar_prefetch = 1 : i64, scratch_operands = 2 : i64, tpu.core_type = #tpu.core_type<tc>, window_params = [{transform_indices = @transform_0, window_bounds = array<i64: 8, 1>}, {transform_indices = @transform_1, window_bounds = array<i64: 32, 16>}, {pipeline_mode = #tpu.pipeline_mode<synchronous>, transform_indices = @transform_2, window_bounds = array<i64: 16, 384>}, {pipeline_mode = #tpu.pipeline_mode<synchronous>, transform_indices = @transform_3, window_bounds = array<i64: 128, 384>}, {pipeline_mode = #tpu.pipeline_mode<synchronous>, transform_indices = @transform_4, window_bounds = array<i64: 1, 384>}, {pipeline_mode = #tpu.pipeline_mode<synchronous>, transform_indices = @transform_5, window_bounds = array<i64: 1, 128>}, {pipeline_mode = #tpu.pipeline_mode<synchronous>, transform_indices = @transform_6, window_bounds = array<i64: 128, 128>}, {pipeline_mode = #tpu.pipeline_mode<synchronous>, transform_indices = @transform_7, window_bounds = array<i64: 1, 128>}, {transform_indices = @transform_8, window_bounds = array<i64: 8, 128>}, {transform_indices = @transform_9, window_bounds = array<i64: 8, 128>}]} {
    %c4_i32 = arith.constant 4 : i32
    %0 = arith.muli %arg1, %c4_i32 : i32
    %c8_i32 = arith.constant 8 : i32
    %1 = arith.muli %arg0, %c8_i32 : i32
    %2 = arith.index_cast %1 : i32 to index
    %3 = memref.load %arg2[%2] : memref<8xi32, #tpu.memory_space<smem>>
    %c0_i32 = arith.constant 0 : i32
    %4 = arith.cmpi eq, %arg1, %c0_i32 : i32
    %5 = arith.extui %4 : i1 to i32
    %c0_i32_0 = arith.constant 0 : i32
    %6 = arith.cmpi ne, %5, %c0_i32_0 : i32
    scf.if %6 {
      %cst = arith.constant 0.000000e+00 : f32
      %13 = vector.broadcast %cst : f32 to vector<8x128xf32>
      %c0 = arith.constant 0 : index
      %c0_3 = arith.constant 0 : index
      %14 = vector.load %arg14[%c0, %c0_3] : memref<8x128xf32, #tpu.memory_space<vmem>>, vector<8x128xf32>
      tpu.vector_store %arg14[%c0, %c0_3], %13 {strides = array<i32>} : memref<8x128xf32, #tpu.memory_space<vmem>>, vector<8x128xf32>,
    } else {
    }
    %7 = arith.cmpi slt, %0, %3 : i32
    %8 = arith.extui %7 : i1 to i32
    %c0_i32_1 = arith.constant 0 : i32
    %9 = arith.cmpi ne, %8, %c0_i32_1 : i32
    scf.if %9 {
      %c0 = arith.constant 0 : index
      %c0_3 = arith.constant 0 : index
      %13 = vector.load %arg4[%c0, %c0_3] : memref<32x16xbf16, #tpu.memory_space<vmem>>, vector<32x16xbf16>
      %c0_4 = arith.constant 0 : index
      %c0_5 = arith.constant 0 : index
      %14 = vector.load %arg5[%c0_4, %c0_5] : memref<16x384xbf16, #tpu.memory_space<vmem>>, vector<16x384xbf16>
      %cst = arith.constant dense<0.000000e+00> : vector<32x384xf32>
      %15 = tpu.matmul %13, %14, %cst {dimension_numbers = #tpu.dot_dimension_numbers<[1], [0], [0], [1], [0, 0, 1, 1], [], []>} : vector<32x16xbf16>, vector<16x384xbf16>, vector<32x384xf32> -> vector<32x384xf32>
      %c0_6 = arith.constant 0 : index
      %c0_7 = arith.constant 0 : index
      %16 = vector.load %arg7[%c0_6, %c0_7] : memref<1x384xf32, #tpu.memory_space<vmem>>, vector<1x384xf32>
      %17 = vector.broadcast %16 : vector<1x384xf32> to vector<32x384xf32>
      %18 = arith.addf %15, %17 : vector<32x384xf32>
      %19 = arith.truncf %18 : vector<32x384xf32> to vector<32x384xbf16>
      %c0_8 = arith.constant 0 : index
      %c0_9 = arith.constant 0 : index
      %20 = vector.load %arg13[%c0_8, %c0_9] : memref<32x384xbf16, #tpu.memory_space<vmem>>, vector<32x384xbf16>
      tpu.vector_store %arg13[%c0_8, %c0_9], %19 {strides = array<i32>} : memref<32x384xbf16, #tpu.memory_space<vmem>>, vector<32x384xbf16>,
      %c0_10 = arith.constant 0 : index
      %c0_11 = arith.constant 0 : index
      %21 = vector.load %arg8[%c0_10, %c0_11] : memref<1x128xf32, #tpu.memory_space<vmem>>, vector<1x128xf32>
      %22 = vector.shape_cast %21 : vector<1x128xf32> to vector<1x128xf32>
      %23 = vector.broadcast %22 : vector<1x128xf32> to vector<8x128xf32>
      %c0_12 = arith.constant 0 : index
      %c0_13 = arith.constant 0 : index
      %24 = vector.load %arg3[%c0_12, %c0_13] : memref<8x1xi32, #tpu.memory_space<vmem>>, vector<8x1xi32>
      %25 = arith.subi %3, %0 : i32
      %c4_i32_14 = arith.constant 4 : i32
      %26 = arith.minsi %c4_i32_14, %25 : i32
      %c0_i32_15 = arith.constant 0 : i32
      %27 = arith.subi %26, %c0_i32_15 : i32
      %c1_i32_16 = arith.constant 1 : i32
      %c1_i32_17 = arith.constant 1 : i32
      %28 = arith.subi %c1_i32_16, %c1_i32_17 : i32
      %29 = arith.addi %27, %28 : i32
      %c1_i32_18 = arith.constant 1 : i32
      %30 = arith.divsi %29, %c1_i32_18 : i32
      %c1_i32_19 = arith.constant 1 : i32
      %c0_i32_20 = arith.constant 0 : i32
      %c0_i32_21 = arith.constant 0 : i32
      %31 = arith.subi %30, %c0_i32_21 : i32
      %32 = arith.addi %c0_i32_21, %31 : i32
      %c1_i32_22 = arith.constant 1 : i32
      scf.for %arg15 = %c0_i32_21 to %32 step %c1_i32_22  : i32 {
        %33 = arith.muli %arg15, %c1_i32_19 : i32
        %34 = arith.addi %c0_i32_20, %33 : i32
        %c0_23 = arith.constant 0 : index
        %c0_24 = arith.constant 0 : index
        %35 = vector.load %arg14[%c0_23, %c0_24] : memref<8x128xf32, #tpu.memory_space<vmem>>, vector<8x128xf32>
        %c8_i32_25 = arith.constant 8 : i32
        %36 = arith.muli %34, %c8_i32_25 : i32
        %37 = tpu.assume_multiple %36, 8 : i32
        %38 = arith.index_cast %37 : i32 to index
        %c0_26 = arith.constant 0 : index
        %39 = vector.load %arg13[%38, %c0_26] : memref<32x384xbf16, #tpu.memory_space<vmem>>, vector<8x384xbf16>
        %40 = arith.extf %39 : vector<8x384xbf16> to vector<8x384xf32>
        %41 = arith.truncf %35 : vector<8x128xf32> to vector<8x128xbf16>
        %c0_27 = arith.constant 0 : index
        %c0_28 = arith.constant 0 : index
        %42 = vector.load %arg6[%c0_27, %c0_28] : memref<128x384xbf16, #tpu.memory_space<vmem>>, vector<128x384xbf16>
        %cst_29 = arith.constant dense<0.000000e+00> : vector<8x384xf32>
        %43 = tpu.matmul %41, %42, %cst_29 {dimension_numbers = #tpu.dot_dimension_numbers<[1], [0], [0], [1], [0, 0, 1, 1], [], []>} : vector<8x128xbf16>, vector<128x384xbf16>, vector<8x384xf32> -> vector<8x384xf32>
        %44 = vector.extract_strided_slice %40 {offsets = [0, 0], sizes = [8, 128], strides = [1, 1]} : vector<8x384xf32> to vector<8x128xf32>
        %45 = vector.extract_strided_slice %40 {offsets = [0, 128], sizes = [8, 128], strides = [1, 1]} : vector<8x384xf32> to vector<8x128xf32>
        %46 = vector.extract_strided_slice %40 {offsets = [0, 256], sizes = [8, 128], strides = [1, 1]} : vector<8x384xf32> to vector<8x128xf32>
        %47 = vector.extract_strided_slice %43 {offsets = [0, 0], sizes = [8, 128], strides = [1, 1]} : vector<8x384xf32> to vector<8x128xf32>
        %48 = vector.extract_strided_slice %43 {offsets = [0, 128], sizes = [8, 128], strides = [1, 1]} : vector<8x384xf32> to vector<8x128xf32>
        %49 = vector.extract_strided_slice %43 {offsets = [0, 256], sizes = [8, 128], strides = [1, 1]} : vector<8x384xf32> to vector<8x128xf32>
        %50 = arith.addf %44, %47 : vector<8x128xf32>
        %cst_30 = arith.constant 5.000000e-01 : f32
        %51 = vector.broadcast %cst_30 : f32 to vector<8x128xf32>
        %52 = arith.mulf %51, %50 : vector<8x128xf32>
        %53 = math.tanh %52 : vector<8x128xf32>
        %cst_31 = arith.constant 5.000000e-01 : f32
        %54 = vector.broadcast %cst_31 : f32 to vector<8x128xf32>
        %55 = arith.mulf %54, %53 : vector<8x128xf32>
        %cst_32 = arith.constant 5.000000e-01 : f32
        %56 = vector.broadcast %cst_32 : f32 to vector<8x128xf32>
        %57 = arith.addf %56, %55 : vector<8x128xf32>
        %58 = arith.addf %45, %48 : vector<8x128xf32>
        %cst_33 = arith.constant 5.000000e-01 : f32
        %59 = vector.broadcast %cst_33 : f32 to vector<8x128xf32>
        %60 = arith.mulf %59, %58 : vector<8x128xf32>
        %61 = math.tanh %60 : vector<8x128xf32>
        %cst_34 = arith.constant 5.000000e-01 : f32
        %62 = vector.broadcast %cst_34 : f32 to vector<8x128xf32>
        %63 = arith.mulf %62, %61 : vector<8x128xf32>
        %cst_35 = arith.constant 5.000000e-01 : f32
        %64 = vector.broadcast %cst_35 : f32 to vector<8x128xf32>
        %65 = arith.addf %64, %63 : vector<8x128xf32>
        %66 = arith.addf %49, %23 : vector<8x128xf32>
        %67 = arith.mulf %57, %66 : vector<8x128xf32>
        %68 = arith.addf %46, %67 : vector<8x128xf32>
        %69 = math.tanh %68 : vector<8x128xf32>
        %cst_36 = arith.constant 1.000000e+00 : f32
        %70 = vector.broadcast %cst_36 : f32 to vector<8x128xf32>
        %71 = arith.subf %70, %65 : vector<8x128xf32>
        %72 = arith.mulf %71, %69 : vector<8x128xf32>
        %73 = arith.mulf %65, %35 : vector<8x128xf32>
        %74 = arith.addf %72, %73 : vector<8x128xf32>
        %75 = arith.addi %0, %34 : i32
        %76 = vector.broadcast %75 : i32 to vector<8x1xi32>
        %77 = arith.cmpi slt, %76, %24 : vector<8x1xi32>
        %78 = vector.shape_cast %77 : vector<8x1xi1> to vector<8x1xi1>
        %79 = vector.broadcast %78 : vector<8x1xi1> to vector<8x128xi1>
        %80 = arith.select %79, %74, %35 : vector<8x128xi1>, vector<8x128xf32>
        %c0_37 = arith.constant 0 : index
        %c0_38 = arith.constant 0 : index
        %81 = vector.load %arg14[%c0_37, %c0_38] : memref<8x128xf32, #tpu.memory_space<vmem>>, vector<8x128xf32>
        tpu.vector_store %arg14[%c0_37, %c0_38], %80 {strides = array<i32>} : memref<8x128xf32, #tpu.memory_space<vmem>>, vector<8x128xf32>,
      }
    } else {
    }
    %c1_i32 = arith.constant 1 : i32
    %10 = arith.cmpi eq, %arg1, %c1_i32 : i32
    %11 = arith.extui %10 : i1 to i32
    %c0_i32_2 = arith.constant 0 : i32
    %12 = arith.cmpi ne, %11, %c0_i32_2 : i32
    scf.if %12 {
      %c0 = arith.constant 0 : index
      %c0_3 = arith.constant 0 : index
      %13 = vector.load %arg14[%c0, %c0_3] : memref<8x128xf32, #tpu.memory_space<vmem>>, vector<8x128xf32>
      %c0_4 = arith.constant 0 : index
      %c0_5 = arith.constant 0 : index
      %14 = vector.load %arg11[%c0_4, %c0_5] : memref<8x128xf32, #tpu.memory_space<vmem>>, vector<8x128xf32>
      tpu.vector_store %arg11[%c0_4, %c0_5], %13 {strides = array<i32>} : memref<8x128xf32, #tpu.memory_space<vmem>>, vector<8x128xf32>,
      %15 = arith.truncf %13 : vector<8x128xf32> to vector<8x128xbf16>
      %c0_6 = arith.constant 0 : index
      %c0_7 = arith.constant 0 : index
      %16 = vector.load %arg9[%c0_6, %c0_7] : memref<128x128xbf16, #tpu.memory_space<vmem>>, vector<128x128xbf16>
      %cst = arith.constant dense<0.000000e+00> : vector<8x128xf32>
      %17 = tpu.matmul %15, %16, %cst {dimension_numbers = #tpu.dot_dimension_numbers<[1], [0], [0], [1], [0, 0, 1, 1], [], []>} : vector<8x128xbf16>, vector<128x128xbf16>, vector<8x128xf32> -> vector<8x128xf32>
      %c0_8 = arith.constant 0 : index
      %c0_9 = arith.constant 0 : index
      %18 = vector.load %arg10[%c0_8, %c0_9] : memref<1x128xf32, #tpu.memory_space<vmem>>, vector<1x128xf32>
      %19 = vector.broadcast %18 : vector<1x128xf32> to vector<8x128xf32>
      %20 = arith.addf %17, %19 : vector<8x128xf32>
      %21 = tpu.iota {dimensions = array<i32: 1>} : vector<8x128xi32>
      %c3_i32 = arith.constant 3 : i32
      %22 = vector.broadcast %c3_i32 : i32 to vector<8x128xi32>
      %23 = arith.cmpi slt, %21, %22 : vector<8x128xi32>
      %cst_10 = arith.constant -1.000000e+30 : f32
      %24 = vector.broadcast %cst_10 : f32 to vector<8x128xf32>
      %25 = arith.select %23, %20, %24 : vector<8x128xi1>, vector<8x128xf32>
      %cst_11 = arith.constant dense<0xFF800000> : vector<8xf32>
      %26 = vector.multi_reduction <maximumf>, %25, %cst_11 [1] : vector<8x128xf32> to vector<8xf32>
      %27 = vector.shape_cast %26 : vector<8xf32> to vector<8x1xf32>
      %28 = vector.broadcast %27 : vector<8x1xf32> to vector<8x128xf32>
      %29 = arith.subf %25, %28 : vector<8x128xf32>
      %30 = math.exp %29 : vector<8x128xf32>
      %cst_12 = arith.constant dense<0.000000e+00> : vector<8xf32>
      %31 = vector.multi_reduction <add>, %30, %cst_12 [1] : vector<8x128xf32> to vector<8xf32>
      %32 = vector.shape_cast %31 : vector<8xf32> to vector<8x1xf32>
      %33 = math.log %32 : vector<8x1xf32>
      %34 = arith.addf %33, %27 : vector<8x1xf32>
      %35 = vector.broadcast %34 : vector<8x1xf32> to vector<8x128xf32>
      %36 = arith.subf %25, %35 : vector<8x128xf32>
      %c0_13 = arith.constant 0 : index
      %c0_14 = arith.constant 0 : index
      %37 = vector.load %arg12[%c0_13, %c0_14] : memref<8x128xf32, #tpu.memory_space<vmem>>, vector<8x128xf32>
      tpu.vector_store %arg12[%c0_13, %c0_14], %36 {strides = array<i32>} : memref<8x128xf32, #tpu.memory_space<vmem>>, vector<8x128xf32>,
    } else {
    }
    return
  }
  func.func @transform_0(%arg0: i32, %arg1: i32, %arg2: memref<8xi32, #tpu.memory_space<smem>>) -> (i32, i32) {
    %c0_i32 = arith.constant 0 : i32
    %c0_i32_0 = arith.constant 0 : i32
    return %arg0, %c0_i32 : i32, i32
  }
  func.func @transform_1(%arg0: i32, %arg1: i32, %arg2: memref<8xi32, #tpu.memory_space<smem>>) -> (i32, i32) {
    %c2_i32 = arith.constant 2 : i32
    %0 = arith.muli %arg0, %c2_i32 : i32
    %1 = arith.addi %0, %arg1 : i32
    %c0_i32 = arith.constant 0 : i32
    %c0_i32_0 = arith.constant 0 : i32
    return %1, %c0_i32 : i32, i32
  }
  func.func @transform_2(%arg0: i32, %arg1: i32, %arg2: memref<8xi32, #tpu.memory_space<smem>>) -> (i32, i32) {
    %c0_i32 = arith.constant 0 : i32
    %c0_i32_0 = arith.constant 0 : i32
    %c0_i32_1 = arith.constant 0 : i32
    return %c0_i32, %c0_i32_0 : i32, i32
  }
  func.func @transform_3(%arg0: i32, %arg1: i32, %arg2: memref<8xi32, #tpu.memory_space<smem>>) -> (i32, i32) {
    %c0_i32 = arith.constant 0 : i32
    %c0_i32_0 = arith.constant 0 : i32
    %c0_i32_1 = arith.constant 0 : i32
    return %c0_i32, %c0_i32_0 : i32, i32
  }
  func.func @transform_4(%arg0: i32, %arg1: i32, %arg2: memref<8xi32, #tpu.memory_space<smem>>) -> (i32, i32) {
    %c0_i32 = arith.constant 0 : i32
    %c0_i32_0 = arith.constant 0 : i32
    %c0_i32_1 = arith.constant 0 : i32
    return %c0_i32, %c0_i32_0 : i32, i32
  }
  func.func @transform_5(%arg0: i32, %arg1: i32, %arg2: memref<8xi32, #tpu.memory_space<smem>>) -> (i32, i32) {
    %c0_i32 = arith.constant 0 : i32
    %c0_i32_0 = arith.constant 0 : i32
    %c0_i32_1 = arith.constant 0 : i32
    return %c0_i32, %c0_i32_0 : i32, i32
  }
  func.func @transform_6(%arg0: i32, %arg1: i32, %arg2: memref<8xi32, #tpu.memory_space<smem>>) -> (i32, i32) {
    %c0_i32 = arith.constant 0 : i32
    %c0_i32_0 = arith.constant 0 : i32
    %c0_i32_1 = arith.constant 0 : i32
    return %c0_i32, %c0_i32_0 : i32, i32
  }
  func.func @transform_7(%arg0: i32, %arg1: i32, %arg2: memref<8xi32, #tpu.memory_space<smem>>) -> (i32, i32) {
    %c0_i32 = arith.constant 0 : i32
    %c0_i32_0 = arith.constant 0 : i32
    %c0_i32_1 = arith.constant 0 : i32
    return %c0_i32, %c0_i32_0 : i32, i32
  }
  func.func @transform_8(%arg0: i32, %arg1: i32, %arg2: memref<8xi32, #tpu.memory_space<smem>>) -> (i32, i32) {
    %c0_i32 = arith.constant 0 : i32
    %c0_i32_0 = arith.constant 0 : i32
    return %arg0, %c0_i32 : i32, i32
  }
  func.func @transform_9(%arg0: i32, %arg1: i32, %arg2: memref<8xi32, #tpu.memory_space<smem>>) -> (i32, i32) {
    %c0_i32 = arith.constant 0 : i32
    %c0_i32_0 = arith.constant 0 : i32
    return %arg0, %c0_i32 : i32, i32
  }
}

</mosaic_0001>

<llo_original>
// kernel: tpu_custom_call.1
$region0: #{tpu_custom_call.1}
  #allocation0 [shape = 'u32[]', space=smem, size = 0x4, offset = 0x4, fixed_abs, tag = 'smem constant byte address 0x4 - core index']
  #allocation1 [shape = 'u32[72,128]{1,0:T(1,128)}', space=vmem, size = 0x9000, scoped, tag = 'internal scratch']
  #allocation2 [shape = 'bf16[32,384]{1,0:T(8,128)(2,1)}', space=vmem, size = 0x6000, scoped, tag = 'scratch operand']
  #allocation3 [shape = 'f32[8,128]{1,0:T(8,128)}', space=vmem, size = 0x1000, scoped, tag = 'scratch operand']
  #allocation4 [shape = 's32[1]{0}', space=sflag, size = 0x4, scoped, tag = 'scoped memory for tpu_custom_call.1']
  #allocation5 [shape = 'u8[512]{0}', space=smem, size = 0x200, scoped, tag = 'prefetched SMEM operand 0']
  %s0 = inlined_call_operand.vmem [shape: s32[8], index: 0, kind: input, shape index: {}]
  %s1 = inlined_call_operand.vmem [shape: s32[8,1], index: 1, kind: input, shape index: {}]
  %s2 = inlined_call_operand.vmem [shape: bf16[64,16], index: 2, kind: input, shape index: {}]
  %s3 = inlined_call_operand.vmem [shape: bf16[16,384], index: 3, kind: input, shape index: {}]
  %s4 = inlined_call_operand.hbm [shape: bf16[128,384], index: 4, kind: input, shape index: {}]
  %s5 = inlined_call_operand.vmem [shape: f32[1,384], index: 5, kind: input, shape index: {}]
  %s6 = inlined_call_operand.vmem [shape: f32[1,128], index: 6, kind: input, shape index: {}]
  %s7 = inlined_call_operand.hbm [shape: bf16[128,128], index: 7, kind: input, shape index: {}]
  %s8 = inlined_call_operand.vmem [shape: f32[1,128], index: 8, kind: input, shape index: {}]
  %s9 = inlined_call_operand.hbm [shape: f32[8,128], index: 9, kind: output, shape index: {0}]
  %s10 = inlined_call_operand.hbm [shape: f32[8,128], index: 10, kind: output, shape index: {1}]
  %11 = xla_tuple %s9, %s10
  %s12 = sld [smem:[#allocation0]]
  $region100: #{tpu_custom_call.1} parent=0
    _
  %s14 = ssub.s32 1, %s12
  %s15 = scalar_select 0, %s14, %s12
  %s17 = sshll.u32 %s0, 4
  %s18 = int_to_ptr.vmem [resolvable:$true] %s17
  %20 = dma.vmem_to_smem %s18, 16, [#allocation5], [#allocation4]
  %22 = dma.done [#allocation4], 16
  %23 = sfence
  $region1: #{tpu_custom_call.1} parent=0
    #allocation6 [shape = 'u8[98304]{0}', space=vmem, size = 0x18000, scoped, tag = 'input window, operand 4, single buffered']
    #allocation7 [shape = 's32[2]{0}', space=sflag, size = 0x8, scoped, tag = 'scoped memory for tpu_custom_call.1']
    #allocation8 [shape = 's32[2]{0}', space=sflag, size = 0x8, scoped, tag = 'scoped memory for tpu_custom_call.1']
    #allocation9 [shape = 'u8[32768]{0}', space=vmem, size = 0x8000, scoped, tag = 'input window, operand 7, single buffered']
    #allocation10 [shape = 's32[1]{0}', space=sflag, size = 0x4, scoped, tag = 'scoped memory for tpu_custom_call.1']
    #allocation11 [shape = 'u8[4096]{0}', space=vmem, size = 0x1000, scoped, tag = 'output window, operand 0, single buffered']
    #allocation12 [shape = 'u8[4096]{0}', space=vmem, size = 0x1000, scoped, tag = 'output window, operand 1, single buffered']
    #allocation13 [shape = 's32[1]{0}', space=sflag, size = 0x4, scoped, tag = 'scoped memory for tpu_custom_call.1']
    %24 = vsyncpa [#allocation7], 0
    %25 = vsyncpa [#allocation10], 0
    %26 = vsyncpa [#allocation8], 0
    %27 = vsyncpa [#allocation13], 0
    loop: start=0, step=1, limit=4
    $region2: #{tpu_custom_call.1} parent=1 // loop_pre_header
      _
    $region3: #{tpu_custom_call.1} parent=1 // loop_header
      %s29 = sphi 0, %s33
      %p30 = scmp.ge.s32.totalorder %s29, 4
      %s36 = sphi 0, %s48
      %s37 = sphi 0, %s44
      %s38 = sphi 0, %s36
      %s39 = sphi 0, %s37
      %s40 = sphi 0, %s38
      %s41 = sphi 0, %s39
      %s51 = sphi 0, %s53
      %s54 = sphi 0, %s51
      %s55 = sphi 0, %s54
      %s71 = sphi 0, %s55
      %s81 = sphi 0, %s83
      %s84 = sphi 0, %s81
      %s85 = sphi 0, %s84
      %s101 = sphi 0, %s85
      %s105 = sphi 0, %s105
      %s107 = sphi 0, %s105
      %s108 = sphi 0, %s107
      %s122 = sphi 0, %s108
      %s126 = sphi 0, %s126
      %s128 = sphi 0, %s126
      %s129 = sphi 0, %s128
      %s143 = sphi 0, %s129
      %s147 = sphi 0, %s147
      %s149 = sphi 0, %s147
      %s150 = sphi 0, %s149
      %s164 = sphi 0, %s150
      %s168 = sphi 0, %s168
      %s170 = sphi 0, %s168
      %s171 = sphi 0, %s170
      %s185 = sphi 0, %s171
      %s189 = sphi 0, %s189
      %s191 = sphi 0, %s189
      %s192 = sphi 0, %s191
      %s206 = sphi 0, %s192
      %s210 = sphi 0, %s210
      %s212 = sphi 0, %s210
      %s213 = sphi 0, %s212
      %s227 = sphi 0, %s213
      %s233 = sphi 0, %s235
      %s236 = sphi 0, %s233
      %s237 = sphi 0, %s236
      %s253 = sphi 0, %s237
      %s259 = sphi 0, %s261
      %s262 = sphi 0, %s259
      %s263 = sphi 0, %s262
      %s279 = sphi 0, %s263
    $region4: #{tpu_custom_call.1} parent=1 // loop_header_branch
      %32 = sbr.rel (%p30) target = $region8
    $region5: #{tpu_custom_call.1} parent=1 // loop_body
      %s34 = ssub.s32 %s29, 1
      %s35 = ssub.s32 %s29, 2
      %s42 = sadd.s32 1, %s37
      %p43 = scmp.ge.s32.totalorder %s42, 2
      %s44 = scalar_select %p43, 0, %s42
      %s45 = sadd.s32 1, %s36
      %s46 = scalar_select %p43, %s45, %s36
      %p47 = scmp.ge.s32.totalorder %s46, 1
      %s48 = scalar_select %p47, 0, %s46
      %s49 = ssub.s32 %s36, %s48
      %p50 = scmp.eq.s32.totalorder %s49, 0
      %s52 = sadd.s32 %s51, 1
      %s53 = scalar_select %p50, %s51, %s52
      %p56 = pneg %p50
      %p57 = scmp.eq.s32.totalorder %s29, 1
      %p58 = por %p56, %p57
      %p59 = scmp.ne.s32.totalorder %s51, %s54
      %p60 = scmp.eq.s32.totalorder %s29, 0
      %p61 = por %p59, %p60
      %p62 = scmp.ne.s32.totalorder %s51, %s54
      %p63 = scmp.eq.s32.totalorder %s34, 1
      %p64 = por %p62, %p63
      %p65 = scmp.ne.s32.totalorder %s54, %s55
      %p66 = scmp.eq.s32.totalorder %s34, 0
      %p67 = por %p65, %p66
      %p68 = scmp.ne.s32.totalorder %s54, %s55
      %p69 = scmp.eq.s32.totalorder %s35, 1
      %p70 = por %p68, %p69
      %p72 = scmp.ne.s32.totalorder %s55, %s71
      %p73 = scmp.eq.s32.totalorder %s35, 0
      %p74 = por %p72, %p73
      %s75 = smul.u32 %s36, 2
      %s76 = sadd.s32 %s75, %s37
      %s77 = smul.u32 %s48, 2
      %s78 = sadd.s32 %s77, %s44
      %s79 = ssub.s32 %s76, %s78
      %p80 = scmp.eq.s32.totalorder %s79, 0
      %s82 = sadd.s32 %s81, 1
      %s83 = scalar_select %p80, %s81, %s82
      %p86 = pneg %p80
      %p87 = scmp.eq.s32.totalorder %s29, 1
      %p88 = por %p86, %p87
      %p89 = scmp.ne.s32.totalorder %s81, %s84
      %p90 = scmp.eq.s32.totalorder %s29, 0
      %p91 = por %p89, %p90
      %p92 = scmp.ne.s32.totalorder %s81, %s84
      %p93 = scmp.eq.s32.totalorder %s34, 1
      %p94 = por %p92, %p93
      %p95 = scmp.ne.s32.totalorder %s84, %s85
      %p96 = scmp.eq.s32.totalorder %s34, 0
      %p97 = por %p95, %p96
      %p98 = scmp.ne.s32.totalorder %s84, %s85
      %p99 = scmp.eq.s32.totalorder %s35, 1
      %p100 = por %p98, %p99
      %p102 = scmp.ne.s32.totalorder %s85, %s101
      %p103 = scmp.eq.s32.totalorder %s35, 0
      %p104 = por %p102, %p103
      %s106 = sadd.s32 %s105, 1
      %p109 = scmp.eq.s32.totalorder %s29, 1
      %p110 = scmp.ne.s32.totalorder %s105, %s107
      %p111 = scmp.eq.s32.totalorder %s29, 0
      %p112 = por %p110, %p111
      %p113 = scmp.ne.s32.totalorder %s105, %s107
      %p114 = scmp.eq.s32.totalorder %s34, 1
      %p115 = por %p113, %p114
      %p116 = scmp.ne.s32.totalorder %s107, %s108
      %p117 = scmp.eq.s32.totalorder %s34, 0
      %p118 = por %p116, %p117
      %p119 = scmp.ne.s32.totalorder %s107, %s108
      %p120 = scmp.eq.s32.totalorder %s35, 1
      %p121 = por %p119, %p120
      %p123 = scmp.ne.s32.totalorder %s108, %s122
      %p124 = scmp.eq.s32.totalorder %s35, 0
      %p125 = por %p123, %p124
      %s127 = sadd.s32 %s126, 1
      %p130 = scmp.eq.s32.totalorder %s29, 1
      %p131 = scmp.ne.s32.totalorder %s126, %s128
      %p132 = scmp.eq.s32.totalorder %s29, 0
      %p133 = por %p131, %p132
      %p134 = scmp.ne.s32.totalorder %s126, %s128
      %p135 = scmp.eq.s32.totalorder %s34, 1
      %p136 = por %p134, %p135
      %p137 = scmp.ne.s32.totalorder %s128, %s129
      %p138 = scmp.eq.s32.totalorder %s34, 0
      %p139 = por %p137, %p138
      %p140 = scmp.ne.s32.totalorder %s128, %s129
      %p141 = scmp.eq.s32.totalorder %s35, 1
      %p142 = por %p140, %p141
      %p144 = scmp.ne.s32.totalorder %s129, %s143
      %p145 = scmp.eq.s32.totalorder %s35, 0
      %p146 = por %p144, %p145
      %s148 = sadd.s32 %s147, 1
      %p151 = scmp.eq.s32.totalorder %s29, 1
      %p152 = scmp.ne.s32.totalorder %s147, %s149
      %p153 = scmp.eq.s32.totalorder %s29, 0
      %p154 = por %p152, %p153
      %p155 = scmp.ne.s32.totalorder %s147, %s149
      %p156 = scmp.eq.s32.totalorder %s34, 1
      %p157 = por %p155, %p156
      %p158 = scmp.ne.s32.totalorder %s149, %s150
      %p159 = scmp.eq.s32.totalorder %s34, 0
      %p160 = por %p158, %p159
      %p161 = scmp.ne.s32.totalorder %s149, %s150
      %p162 = scmp.eq.s32.totalorder %s35, 1
      %p163 = por %p161, %p162
      %p165 = scmp.ne.s32.totalorder %s150, %s164
      %p166 = scmp.eq.s32.totalorder %s35, 0
      %p167 = por %p165, %p166
      %s169 = sadd.s32 %s168, 1
      %p172 = scmp.eq.s32.totalorder %s29, 1
      %p173 = scmp.ne.s32.totalorder %s168, %s170
      %p174 = scmp.eq.s32.totalorder %s29, 0
      %p175 = por %p173, %p174
      %p176 = scmp.ne.s32.totalorder %s168, %s170
      %p177 = scmp.eq.s32.totalorder %s34, 1
      %p178 = por %p176, %p177
      %p179 = scmp.ne.s32.totalorder %s170, %s171
      %p180 = scmp.eq.s32.totalorder %s34, 0
      %p181 = por %p179, %p180
      %p182 = scmp.ne.s32.totalorder %s170, %s171
      %p183 = scmp.eq.s32.totalorder %s35, 1
      %p184 = por %p182, %p183
      %p186 = scmp.ne.s32.totalorder %s171, %s185
      %p187 = scmp.eq.s32.totalorder %s35, 0
      %p188 = por %p186, %p187
      %s190 = sadd.s32 %s189, 1
      %p193 = scmp.eq.s32.totalorder %s29, 1
      %p194 = scmp.ne.s32.totalorder %s189, %s191
      %p195 = scmp.eq.s32.totalorder %s29, 0
      %p196 = por %p194, %p195
      %p197 = scmp.ne.s32.totalorder %s189, %s191
      %p198 = scmp.eq.s32.totalorder %s34, 1
      %p199 = por %p197, %p198
      %p200 = scmp.ne.s32.totalorder %s191, %s192
      %p201 = scmp.eq.s32.totalorder %s34, 0
      %p202 = por %p200, %p201
      %p203 = scmp.ne.s32.totalorder %s191, %s192
      %p204 = scmp.eq.s32.totalorder %s35, 1
      %p205 = por %p203, %p204
      %p207 = scmp.ne.s32.totalorder %s192, %s206
      %p208 = scmp.eq.s32.totalorder %s35, 0
      %p209 = por %p207, %p208
      %s211 = sadd.s32 %s210, 1
      %p214 = scmp.eq.s32.totalorder %s29, 1
      %p215 = scmp.ne.s32.totalorder %s210, %s212
      %p216 = scmp.eq.s32.totalorder %s29, 0
      %p217 = por %p215, %p216
      %p218 = scmp.ne.s32.totalorder %s210, %s212
      %p219 = scmp.eq.s32.totalorder %s34, 1
      %p220 = por %p218, %p219
      %p221 = scmp.ne.s32.totalorder %s212, %s213
      %p222 = scmp.eq.s32.totalorder %s34, 0
      %p223 = por %p221, %p222
      %p224 = scmp.ne.s32.totalorder %s212, %s213
      %p225 = scmp.eq.s32.totalorder %s35, 1
      %p226 = por %p224, %p225
      %p228 = scmp.ne.s32.totalorder %s213, %s227
      %p229 = scmp.eq.s32.totalorder %s35, 0
      %p230 = por %p228, %p229
      %s231 = ssub.s32 %s36, %s48
      %p232 = scmp.eq.s32.totalorder %s231, 0
      %s234 = sadd.s32 %s233, 1
      %s235 = scalar_select %p232, %s233, %s234
      %p238 = pneg %p232
      %p239 = scmp.eq.s32.totalorder %s29, 1
      %p240 = por %p238, %p239
      %p241 = scmp.ne.s32.totalorder %s233, %s236
      %p242 = scmp.eq.s32.totalorder %s29, 0
      %p243 = por %p241, %p242
      %p244 = scmp.ne.s32.totalorder %s233, %s236
      %p245 = scmp.eq.s32.totalorder %s34, 1
      %p246 = por %p244, %p245
      %p247 = scmp.ne.s32.totalorder %s236, %s237
      %p248 = scmp.eq.s32.totalorder %s34, 0
      %p249 = por %p247, %p248
      %p250 = scmp.ne.s32.totalorder %s236, %s237
      %p251 = scmp.eq.s32.totalorder %s35, 1
      %p252 = por %p250, %p251
      %p254 = scmp.ne.s32.totalorder %s237, %s253
      %p255 = scmp.eq.s32.totalorder %s35, 0
      %p256 = por %p254, %p255
      %s257 = ssub.s32 %s36, %s48
      %p258 = scmp.eq.s32.totalorder %s257, 0
      %s260 = sadd.s32 %s259, 1
      %s261 = scalar_select %p258, %s259, %s260
      %p264 = pneg %p258
      %p265 = scmp.eq.s32.totalorder %s29, 1
      %p266 = por %p264, %p265
      %p267 = scmp.ne.s32.totalorder %s259, %s262
      %p268 = scmp.eq.s32.totalorder %s29, 0
      %p269 = por %p267, %p268
      %p270 = scmp.ne.s32.totalorder %s259, %s262
      %p271 = scmp.eq.s32.totalorder %s34, 1
      %p272 = por %p270, %p271
      %p273 = scmp.ne.s32.totalorder %s262, %s263
      %p274 = scmp.eq.s32.totalorder %s34, 0
      %p275 = por %p273, %p274
      %p276 = scmp.ne.s32.totalorder %s262, %s263
      %p277 = scmp.eq.s32.totalorder %s35, 1
      %p278 = por %p276, %p277
      %p280 = scmp.ne.s32.totalorder %s263, %s279
      %p281 = scmp.eq.s32.totalorder %s35, 0
      %p282 = por %p280, %p281
      %p283 = scmp.le.s32.totalorder 1, %s29
      %p284 = scmp.lt.s32.totalorder %s29, 3
      %p285 = pnand %p283, %p284
      %p286 = pneg %p285
      // Predicated region
      $region9: #{tpu_custom_call.1} parent=5 // pred_check
        _
      $region10: #{tpu_custom_call.1} parent=5 // pred_check_branch
        %288 = sbr.rel (%p285) target = $region12
      $region11: #{tpu_custom_call.1} parent=5 // pred_region
        %s289 = ssub.s32 %s29, 1
        // Predicated region
        $region13: #{tpu_custom_call.1} parent=11 // pred_check
          %p290 = pneg %p67
        $region14: #{tpu_custom_call.1} parent=11 // pred_check_branch
          %292 = sbr.rel (%p290) target = $region16
        $region15: #{tpu_custom_call.1} parent=11 // pred_region
          %p293 = scmp.lt.s32.totalorder %s38, 0
          %s294 = scalar_select %p293, %s38, 0
          %s295 = smul.addr %s294, 8
          %s296 = scalar_lea.vmem %s1, %s295
        $region16: #{tpu_custom_call.1} parent=11 // pred_fallthru
          _
        // Predicated region
        $region17: #{tpu_custom_call.1} parent=11 // pred_check
          %p297 = pneg %p118
        $region18: #{tpu_custom_call.1} parent=11 // pred_check_branch
          %299 = sbr.rel (%p297) target = $region20
        $region19: #{tpu_custom_call.1} parent=11 // pred_region
          _
        $region20: #{tpu_custom_call.1} parent=11 // pred_fallthru
          _
        // Predicated region
        $region21: #{tpu_custom_call.1} parent=11 // pred_check
          %p300 = pneg %p139
        $region22: #{tpu_custom_call.1} parent=11 // pred_check_branch
          %302 = sbr.rel (%p300) target = $region24
        $region23: #{tpu_custom_call.1} parent=11 // pred_region
          %304 = vsyncadd [#allocation7], 0
          %s305 = sshll.u32 %s4, 4
          %s306 = int_to_ptr.hbm [resolvable:$true] %s305
          %s307 = sshll.u32 [#allocation6], 4
          %s308 = int_to_ptr.vmem [resolvable:$true] %s307
          %313 = dma.hbm_to_vmem [thread:$0]  %s306, 3072, %s308, [#allocation7], 192, 192, 12
        $region24: #{tpu_custom_call.1} parent=11 // pred_fallthru
          _
        // Predicated region
        $region25: #{tpu_custom_call.1} parent=11 // pred_check
          %p314 = pneg %p160
        $region26: #{tpu_custom_call.1} parent=11 // pred_check_branch
          %316 = sbr.rel (%p314) target = $region28
        $region27: #{tpu_custom_call.1} parent=11 // pred_region
          _
        $region28: #{tpu_custom_call.1} parent=11 // pred_fallthru
          _
        // Predicated region
        $region29: #{tpu_custom_call.1} parent=11 // pred_check
          %p317 = pneg %p181
        $region30: #{tpu_custom_call.1} parent=11 // pred_check_branch
          %319 = sbr.rel (%p317) target = $region32
        $region31: #{tpu_custom_call.1} parent=11 // pred_region
          _
        $region32: #{tpu_custom_call.1} parent=11 // pred_fallthru
          _
        // Predicated region
        $region33: #{tpu_custom_call.1} parent=11 // pred_check
          %p320 = pneg %p202
        $region34: #{tpu_custom_call.1} parent=11 // pred_check_branch
          %322 = sbr.rel (%p320) target = $region36
        $region35: #{tpu_custom_call.1} parent=11 // pred_region
          %324 = vsyncadd [#allocation10], 0
          %s325 = sshll.u32 %s7, 4
          %s326 = int_to_ptr.hbm [resolvable:$true] %s325
          %s327 = sshll.u32 [#allocation9], 4
          %s328 = int_to_ptr.vmem [resolvable:$true] %s327
          %333 = dma.hbm_to_vmem [thread:$0]  %s326, 1024, %s328, [#allocation10], 64, 64, 4
        $region36: #{tpu_custom_call.1} parent=11 // pred_fallthru
          _
        // Predicated region
        $region37: #{tpu_custom_call.1} parent=11 // pred_check
          %p334 = pneg %p223
        $region38: #{tpu_custom_call.1} parent=11 // pred_check_branch
          %336 = sbr.rel (%p334) target = $region40
        $region39: #{tpu_custom_call.1} parent=11 // pred_region
          _
        $region40: #{tpu_custom_call.1} parent=11 // pred_fallthru
          _
      $region12: #{tpu_custom_call.1} parent=5 // pred_fallthru
        _
      %p337 = scmp.lt.s32.totalorder %s29, 2
      // Predicated region
      $region41: #{tpu_custom_call.1} parent=5 // pred_check
        %p338 = pneg %p337
      $region42: #{tpu_custom_call.1} parent=5 // pred_check_branch
        %340 = sbr.rel (%p338) target = $region44
      $region43: #{tpu_custom_call.1} parent=5 // pred_region
        // Predicated region
        $region45: #{tpu_custom_call.1} parent=43 // pred_check
          %p341 = pneg %p91
        $region46: #{tpu_custom_call.1} parent=43 // pred_check_branch
          %343 = sbr.rel (%p341) target = $region48
        $region47: #{tpu_custom_call.1} parent=43 // pred_region
          %s344 = smul.u32 %s36, 2
          %s345 = sadd.s32 %s344, %s37
          %s346 = smul.u32 4, %s345
          %p347 = scmp.lt.s32.totalorder %s346, 7
          %s348 = scalar_select %p347, %s346, 7
          %s349 = smul.addr %s348, 4
          %s350 = scalar_lea.vmem %s2, %s349
          %s351 = smul.u32 %s36, 2
          %s352 = sadd.s32 %s351, %s37
          %s353 = smul.u32 4, %s352
        $region48: #{tpu_custom_call.1} parent=43 // pred_fallthru
          _
      $region44: #{tpu_custom_call.1} parent=5 // pred_fallthru
        _
      %p354 = scmp.le.s32.totalorder 1, %s29
      %p355 = scmp.lt.s32.totalorder %s29, 3
      %p356 = pnand %p354, %p355
      %p357 = pneg %p356
      // Predicated region
      $region49: #{tpu_custom_call.1} parent=5 // pred_check
        _
      $region50: #{tpu_custom_call.1} parent=5 // pred_check_branch
        %359 = sbr.rel (%p356) target = $region52
      $region51: #{tpu_custom_call.1} parent=5 // pred_region
        %s360 = ssub.s32 %s29, 1
        // Predicated region
        $region53: #{tpu_custom_call.1} parent=51 // pred_check
          %p361 = pneg %p139
        $region54: #{tpu_custom_call.1} parent=51 // pred_check_branch
          %363 = sbr.rel (%p361) target = $region56
        $region55: #{tpu_custom_call.1} parent=51 // pred_region
          %365 = dma.done [#allocation7], 3072
        $region56: #{tpu_custom_call.1} parent=51 // pred_fallthru
          _
        // Predicated region
        $region57: #{tpu_custom_call.1} parent=51 // pred_check
          %p366 = pneg %p202
        $region58: #{tpu_custom_call.1} parent=51 // pred_check_branch
          %368 = sbr.rel (%p366) target = $region60
        $region59: #{tpu_custom_call.1} parent=51 // pred_region
          %370 = dma.done [#allocation10], 1024
        $region60: #{tpu_custom_call.1} parent=51 // pred_fallthru
          _
        %p371 = scmp.lt.s32.totalorder %s38, 0
        %s372 = scalar_select %p371, %s38, 0
        %s373 = smul.addr %s372, 8
        %s374 = scalar_lea.vmem %s1, %s373
        %p375 = pneg %p67
        %p376 = pneg %p64
        %s377 = smul.u32 %s38, 2
        %s378 = sadd.s32 %s377, %s39
        %s379 = smul.u32 4, %s378
        %p380 = scmp.lt.s32.totalorder %s379, 7
        %s381 = scalar_select %p380, %s379, 7
        %s382 = smul.addr %s381, 4
        %s383 = scalar_lea.vmem %s2, %s382
        %p384 = pneg %p97
        %p385 = pneg %p94
        %p386 = pneg %p118
        %p387 = pneg %p115
        %p388 = pneg %p139
        %p389 = pneg %p136
        %p390 = pneg %p160
        %p391 = pneg %p157
        %p392 = pneg %p181
        %p393 = pneg %p178
        %p394 = pneg %p202
        %p395 = pneg %p199
        %p396 = pneg %p223
        %p397 = pneg %p220
        %p398 = pneg %p249
        %p399 = pneg %p246
        %p400 = pneg %p275
        %p401 = pneg %p272
        %p402 = scmp.lt.s32.totalorder %s38, 0
        %s403 = scalar_select %p402, %s38, 0
        %s404 = smul.addr %s403, 8
        %s405 = scalar_lea.vmem %s1, %s404
        %s406 = smul.u32 %s38, 2
        %s407 = sadd.s32 %s406, %s39
        %s408 = smul.u32 4, %s407
        %p409 = scmp.lt.s32.totalorder %s408, 7
        %s410 = scalar_select %p409, %s408, 7
        %s411 = smul.addr %s410, 4
        %s412 = scalar_lea.vmem %s2, %s411
        %s413 = smul.u32 %s38, 2
        %s414 = sadd.s32 %s413, %s39
        %s415 = smul.u32 4, %s414
        %s417 = smul.u32 %s39, 4
        %s418 = smul.u32 %s38, 8
        %s419 = sld [smem:[#allocation5 + %s418]]
        %p420 = scmp.eq.s32.totalorder %s39, 0
        // Predicated region
        $region61: #{tpu_custom_call.1} parent=51 // pred_check
          %p421 = pneg %p420
        $region62: #{tpu_custom_call.1} parent=51 // pred_check_branch
          %423 = sbr.rel (%p421) target = $region64
        $region63: #{tpu_custom_call.1} parent=51 // pred_region
          %424 = vst [vmem:[#allocation3] sm:$0xff] 0.0
        $region64: #{tpu_custom_call.1} parent=51 // pred_fallthru
          _
        %p425 = scmp.lt.s32.totalorder %s417, %s419
        // Predicated region
        $region65: #{tpu_custom_call.1} parent=51 // pred_check
          %p426 = pneg %p425
        $region66: #{tpu_custom_call.1} parent=51 // pred_check_branch
          %428 = sbr.rel (%p426) target = $region68
        $region67: #{tpu_custom_call.1} parent=51 // pred_region
          %v429 = vld [vmem:[%s412] sm:$0xf]
          %v430 = vld [vmem:[%s412 + $0x4] sm:$0xf]
          %v431 = vld [vmem:[%s412 + $0x8] sm:$0xf]
          %v432 = vld [vmem:[%s412 + $0xc] sm:$0xf]
          %v433 = vld [vmem:[%s3] sm:$0xff]
          %v434 = vld [vmem:[%s3 + $0x8] sm:$0xf]
          %v435 = vld [vmem:[%s3 + $0xc] sm:$0xff]
          %v436 = vld [vmem:[%s3 + $0x14] sm:$0xf]
          %v437 = vld [vmem:[%s5] sm:$0x7]
          %v439 = vperm.slane %v437, 0
          %v440 = vperm.slane %v437, 1
          %v441 = vperm.slane %v437, 2
          %v449 = vunpack.c.l.b16 %v429
          %v450 = vunpack.c.l.b16 %v430
          %v451 = vunpack.c.l.b16 %v431
          %v452 = vunpack.c.l.b16 %v432
          %v453 = vpack.c.b16 %v450, %v449
          %v454 = vpack.c.b16 %v452, %v451
          %v459 = vunpack.c.l.b16 %v433
          %v460 = vunpack.c.h.b16 %v433
          %v461 = vunpack.c.l.b16 %v434
          %v462 = vunpack.c.l.b16 %v435
          %v463 = vunpack.c.h.b16 %v435
          %v464 = vunpack.c.l.b16 %v436
          %v465 = vpack.c.b16 %v462, %v459
          %v466 = vpack.c.b16 %v463, %v460
          %v467 = vpack.c.b16 %v464, %v461
          %vm471 = vcmask 130048
          %v473 = vsel %vm471, %v453, 0
          %v476 = vsel %vm471, %v454, 0
          %478 = vmatpush.bf16.msra.mxu0 0
          %479 = vmatpush.bf16.msra.mxu0 0
          %480 = vmatpush.bf16.msra.mxu0 0
          %481 = vmatpush.bf16.msra.mxu0 0
          %482 = vmatpush.bf16.msra.mxu0 0
          %483 = vmatpush.bf16.msra.mxu0 0
          %484 = vmatpush.bf16.msra.mxu0 0
          %485 = vmatpush.bf16.msra.mxu0 %v465
          %486 = vmatmul.bf16.gmra.mxu0 %v473
          %v487 = vpop.f32.mrf.mxu0
          %v488 = vadd.f32 %v439, %v487
          %v489 = vpop.f32.mrf.mxu0
          %v490 = vadd.f32 %v439, %v489
          %491 = vmatmul.bf16.gmra.mxu0 %v476
          %v492 = vpop.f32.mrf.mxu0
          %v493 = vadd.f32 %v439, %v492
          %v494 = vpop.f32.mrf.mxu0
          %v495 = vadd.f32 %v439, %v494
          %496 = vdwg.mxu0
          %497 = vmatpush.bf16.msra.mxu0 0
          %498 = vmatpush.bf16.msra.mxu0 0
          %499 = vmatpush.bf16.msra.mxu0 0
          %500 = vmatpush.bf16.msra.mxu0 0
          %501 = vmatpush.bf16.msra.mxu0 0
          %502 = vmatpush.bf16.msra.mxu0 0
          %503 = vmatpush.bf16.msra.mxu0 0
          %504 = vmatpush.bf16.msra.mxu0 %v466
          %505 = vmatmul.bf16.gmra.mxu0 %v473
          %v506 = vpop.f32.mrf.mxu0
          %v507 = vadd.f32 %v440, %v506
          %v508 = vpop.f32.mrf.mxu0
          %v509 = vadd.f32 %v440, %v508
          %510 = vmatmul.bf16.gmra.mxu0 %v476
          %v511 = vpop.f32.mrf.mxu0
          %v512 = vadd.f32 %v440, %v511
          %v513 = vpop.f32.mrf.mxu0
          %v514 = vadd.f32 %v440, %v513
          %515 = vdwg.mxu0
          %516 = vmatpush.bf16.msra.mxu0 0
          %517 = vmatpush.bf16.msra.mxu0 0
          %518 = vmatpush.bf16.msra.mxu0 0
          %519 = vmatpush.bf16.msra.mxu0 0
          %520 = vmatpush.bf16.msra.mxu0 0
          %521 = vmatpush.bf16.msra.mxu0 0
          %522 = vmatpush.bf16.msra.mxu0 0
          %523 = vmatpush.bf16.msra.mxu0 %v467
          %524 = vmatmul.bf16.gmra.mxu0 %v473
          %v525 = vpop.f32.mrf.mxu0
          %v526 = vadd.f32 %v441, %v525
          %v527 = vpop.f32.mrf.mxu0
          %v528 = vadd.f32 %v441, %v527
          %529 = vmatmul.bf16.gmra.mxu0 %v476
          %v530 = vpop.f32.mrf.mxu0
          %v531 = vadd.f32 %v441, %v530
          %v532 = vpop.f32.mrf.mxu0
          %v533 = vadd.f32 %v441, %v532
          %534 = vdwg.mxu0
          %v535 = vpack.c.bf16 %v507, %v488
          %v536 = vpack.c.bf16 %v526, %v526
          %v537 = vpack.c.bf16 %v509, %v490
          %v538 = vpack.c.bf16 %v528, %v528
          %v539 = vpack.c.bf16 %v512, %v493
          %v540 = vpack.c.bf16 %v531, %v531
          %v541 = vpack.c.bf16 %v514, %v495
          %v542 = vpack.c.bf16 %v533, %v533
          %543 = vst [vmem:[#allocation2] sm:$0xff] %v535
          %544 = vst [vmem:[#allocation2 + $0x8] sm:$0xf] %v536
          %545 = vst [vmem:[#allocation2 + $0xc] sm:$0xff] %v537
          %546 = vst [vmem:[#allocation2 + $0x14] sm:$0xf] %v538
          %547 = vst [vmem:[#allocation2 + $0x18] sm:$0xff] %v539
          %548 = vst [vmem:[#allocation2 + $0x20] sm:$0xf] %v540
          %549 = vst [vmem:[#allocation2 + $0x24] sm:$0xff] %v541
          %550 = vst [vmem:[#allocation2 + $0x2c] sm:$0xf] %v542
          %v551 = vld [vmem:[%s6] sm:$0x1]
          %v553 = vperm.slane %v551, 0
          %v555 = vld [vmem:[%s405] sm:$0xff]
          %s556 = ssub.s32 %s419, %s417
          %p557 = scmp.lt.s32.totalorder %s556, 4
          %s558 = scalar_select %p557, %s556, 4
          // While loop
          $region69: #{tpu_custom_call.1} parent=67 // loop_pre_header
            _
          $region70: #{tpu_custom_call.1} parent=67 // loop_header
            %s560 = sphi 0, %s562
            %p561 = scmp.ge.s32.totalorder %s560, %s558
          $region71: #{tpu_custom_call.1} parent=67 // loop_header_branch
            %564 = sbr.rel (%p561) target = $region75
          $region72: #{tpu_custom_call.1} parent=67 // loop_body
            %v565 = vld [vmem:[#allocation3] sm:$0xff]
            %s566 = smul.u32 %s560, 8
            %s567 = sshra.s32 %s566, 3
            %s568 = sand.u32 %s566, 7
            %s569 = smul.u32 %s567, 3
            %s570 = smul.addr %s569, 4
            %s571 = scalar_lea.vmem [#allocation2], %s570
            %v572 = vld [vmem:[%s571] sm:$0xff]
            %v573 = vld [vmem:[%s571 + $0x8] sm:$0xf]
            %v574 = vunpack.c.l.bf16 %v572
            %v575 = vunpack.c.h.bf16 %v572
            %v576 = vunpack.c.l.bf16 %v573
            %v577 = vpack.c.bf16 %v565, %v565
            %v578 = vld [vmem:[#allocation6] sm:$0xff]
            %v579 = vld [vmem:[#allocation6 + $0x8] sm:$0xf]
            %v580 = vld [vmem:[#allocation6 + $0xc] sm:$0xff]
            %v581 = vld [vmem:[#allocation6 + $0x14] sm:$0xf]
            %v582 = vld [vmem:[#allocation6 + $0x18] sm:$0xff]
            %v583 = vld [vmem:[#allocation6 + $0x20] sm:$0xf]
            %v584 = vld [vmem:[#allocation6 + $0x24] sm:$0xff]
            %v585 = vld [vmem:[#allocation6 + $0x2c] sm:$0xf]
            %v586 = vld [vmem:[#allocation6 + $0x30] sm:$0xff]
            %v587 = vld [vmem:[#allocation6 + $0x38] sm:$0xf]
            %v588 = vld [vmem:[#allocation6 + $0x3c] sm:$0xff]
            %v589 = vld [vmem:[#allocation6 + $0x44] sm:$0xf]
            %v590 = vld [vmem:[#allocation6 + $0x48] sm:$0xff]
            %v591 = vld [vmem:[#allocation6 + $0x50] sm:$0xf]
            %v592 = vld [vmem:[#allocation6 + $0x54] sm:$0xff]
            %v593 = vld [vmem:[#allocation6 + $0x5c] sm:$0xf]
            %v594 = vld [vmem:[#allocation6 + $0x60] sm:$0xff]
            %v595 = vld [vmem:[#allocation6 + $0x68] sm:$0xf]
            %v596 = vld [vmem:[#allocation6 + $0x6c] sm:$0xff]
            %v597 = vld [vmem:[#allocation6 + $0x74] sm:$0xf]
            %v598 = vld [vmem:[#allocation6 + $0x78] sm:$0xff]
            %v599 = vld [vmem:[#allocation6 + $0x80] sm:$0xf]
            %v600 = vld [vmem:[#allocation6 + $0x84] sm:$0xff]
            %v601 = vld [vmem:[#allocation6 + $0x8c] sm:$0xf]
            %v602 = vld [vmem:[#allocation6 + $0x90] sm:$0xff]
            %v603 = vld [vmem:[#allocation6 + $0x98] sm:$0xf]
            %v604 = vld [vmem:[#allocation6 + $0x9c] sm:$0xff]
            %v605 = vld [vmem:[#allocation6 + $0xa4] sm:$0xf]
            %v606 = vld [vmem:[#allocation6 + $0xa8] sm:$0xff]
            %v607 = vld [vmem:[#allocation6 + $0xb0] sm:$0xf]
            %v608 = vld [vmem:[#allocation6 + $0xb4] sm:$0xff]
            %v609 = vld [vmem:[#allocation6 + $0xbc] sm:$0xf]
            %v642 = vunpack.c.l.b16 %v578
            %v643 = vunpack.c.h.b16 %v578
            %v644 = vunpack.c.l.b16 %v579
            %v645 = vunpack.c.l.b16 %v580
            %v646 = vunpack.c.h.b16 %v580
            %v647 = vunpack.c.l.b16 %v581
            %v648 = vunpack.c.l.b16 %v582
            %v649 = vunpack.c.h.b16 %v582
            %v650 = vunpack.c.l.b16 %v583
            %v651 = vunpack.c.l.b16 %v584
            %v652 = vunpack.c.h.b16 %v584
            %v653 = vunpack.c.l.b16 %v585
            %v654 = vunpack.c.l.b16 %v586
            %v655 = vunpack.c.h.b16 %v586
            %v656 = vunpack.c.l.b16 %v587
            %v657 = vunpack.c.l.b16 %v588
            %v658 = vunpack.c.h.b16 %v588
            %v659 = vunpack.c.l.b16 %v589
            %v660 = vunpack.c.l.b16 %v590
            %v661 = vunpack.c.h.b16 %v590
            %v662 = vunpack.c.l.b16 %v591
            %v663 = vunpack.c.l.b16 %v592
            %v664 = vunpack.c.h.b16 %v592
            %v665 = vunpack.c.l.b16 %v593
            %v666 = vunpack.c.l.b16 %v594
            %v667 = vunpack.c.h.b16 %v594
            %v668 = vunpack.c.l.b16 %v595
            %v669 = vunpack.c.l.b16 %v596
            %v670 = vunpack.c.h.b16 %v596
            %v671 = vunpack.c.l.b16 %v597
            %v672 = vunpack.c.l.b16 %v598
            %v673 = vunpack.c.h.b16 %v598
            %v674 = vunpack.c.l.b16 %v599
            %v675 = vunpack.c.l.b16 %v600
            %v676 = vunpack.c.h.b16 %v600
            %v677 = vunpack.c.l.b16 %v601
            %v678 = vunpack.c.l.b16 %v602
            %v679 = vunpack.c.h.b16 %v602
            %v680 = vunpack.c.l.b16 %v603
            %v681 = vunpack.c.l.b16 %v604
            %v682 = vunpack.c.h.b16 %v604
            %v683 = vunpack.c.l.b16 %v605
            %v684 = vunpack.c.l.b16 %v606
            %v685 = vunpack.c.h.b16 %v606
            %v686 = vunpack.c.l.b16 %v607
            %v687 = vunpack.c.l.b16 %v608
            %v688 = vunpack.c.h.b16 %v608
            %v689 = vunpack.c.l.b16 %v609
            %v690 = vpack.c.b16 %v645, %v642
            %v691 = vpack.c.b16 %v646, %v643
            %v692 = vpack.c.b16 %v647, %v644
            %v693 = vpack.c.b16 %v651, %v648
            %v694 = vpack.c.b16 %v652, %v649
            %v695 = vpack.c.b16 %v653, %v650
            %v696 = vpack.c.b16 %v657, %v654
            %v697 = vpack.c.b16 %v658, %v655
            %v698 = vpack.c.b16 %v659, %v656
            %v699 = vpack.c.b16 %v663, %v660
            %v700 = vpack.c.b16 %v664, %v661
            %v701 = vpack.c.b16 %v665, %v662
            %v702 = vpack.c.b16 %v669, %v666
            %v703 = vpack.c.b16 %v670, %v667
            %v704 = vpack.c.b16 %v671, %v668
            %v705 = vpack.c.b16 %v675, %v672
            %v706 = vpack.c.b16 %v676, %v673
            %v707 = vpack.c.b16 %v677, %v674
            %v708 = vpack.c.b16 %v681, %v678
            %v709 = vpack.c.b16 %v682, %v679
            %v710 = vpack.c.b16 %v683, %v680
            %v711 = vpack.c.b16 %v687, %v684
            %v712 = vpack.c.b16 %v688, %v685
            %v713 = vpack.c.b16 %v689, %v686
            %738 = vmatpush.bf16.msra.mxu0 %v711
            %739 = vmatpush.bf16.msra.mxu0 %v708
            %740 = vmatpush.bf16.msra.mxu0 %v705
            %741 = vmatpush.bf16.msra.mxu0 %v702
            %742 = vmatpush.bf16.msra.mxu0 %v699
            %743 = vmatpush.bf16.msra.mxu0 %v696
            %744 = vmatpush.bf16.msra.mxu0 %v693
            %745 = vmatpush.bf16.msra.mxu0 %v690
            %746 = vmatmul.bf16.gmra.mxu0 %v577
            %v747 = vpop.f32.mrf.mxu0
            %v748 = vadd.f32 0.0, %v747
            %v749 = vpop.f32.mrf.mxu0
            %750 = vdwg.mxu0
            %751 = vmatpush.bf16.msra.mxu0 %v712
            %752 = vmatpush.bf16.msra.mxu0 %v709
            %753 = vmatpush.bf16.msra.mxu0 %v706
            %754 = vmatpush.bf16.msra.mxu0 %v703
            %755 = vmatpush.bf16.msra.mxu0 %v700
            %756 = vmatpush.bf16.msra.mxu0 %v697
            %757 = vmatpush.bf16.msra.mxu0 %v694
            %758 = vmatpush.bf16.msra.mxu0 %v691
            %759 = vmatmul.bf16.gmra.mxu0 %v577
            %v760 = vpop.f32.mrf.mxu0
            %v761 = vadd.f32 0.0, %v760
            %v762 = vpop.f32.mrf.mxu0
            %763 = vdwg.mxu0
            %764 = vmatpush.bf16.msra.mxu0 %v713
            %765 = vmatpush.bf16.msra.mxu0 %v710
            %766 = vmatpush.bf16.msra.mxu0 %v707
            %767 = vmatpush.bf16.msra.mxu0 %v704
            %768 = vmatpush.bf16.msra.mxu0 %v701
            %769 = vmatpush.bf16.msra.mxu0 %v698
            %770 = vmatpush.bf16.msra.mxu0 %v695
            %771 = vmatpush.bf16.msra.mxu0 %v692
            %772 = vmatmul.bf16.gmra.mxu0 %v577
            %v773 = vpop.f32.mrf.mxu0
            %v774 = vadd.f32 0.0, %v773
            %v775 = vpop.f32.mrf.mxu0
            %776 = vdwg.mxu0
            %v777 = vadd.f32 %v574, %v748
            %v778 = vmul.f32 %v777, 0.5
            %v779 = vtanh.pop %v778
            %v780 = vmul.f32 %v779, 0.5
            %v781 = vadd.f32 %v780, 0.5
            %v782 = vadd.f32 %v575, %v761
            %v783 = vmul.f32 %v782, 0.5
            %v784 = vtanh.pop %v783
            %v785 = vmul.f32 %v784, 0.5
            %v786 = vadd.f32 %v785, 0.5
            %v787 = vadd.f32 %v774, %v553
            %v788 = vmul.f32 %v781, %v787
            %v789 = vadd.f32 %v576, %v788
            %v790 = vtanh.pop %v789
            %v791 = vsub.f32 1.0, %v786
            %v792 = vmul.f32 %v791, %v790
            %v793 = vmul.f32 %v786, %v565
            %v794 = vadd.f32 %v792, %v793
            %s795 = sadd.s32 %s417, %s560
            %v796 = vstv %s795
            %vm797 = vcmp.lt.s32.totalorder %v796, %v555
            %v798 = vsel %vm797, 1, 0
            %799 = vset.pattern.permute.xlu0 0
            %800 = vperm.xlu0 %799, %v798
            %v801 = vpop.permute.xlu0 %800
            %vm802 = vcmp.eq.s32.totalorder %v801, 1
            %v803 = vsel %vm802, %v794, %v565
            %804 = vst [vmem:[#allocation3] sm:$0xff] %v803
          $region73: #{tpu_custom_call.1} parent=67 // loop_footer
            %s562 = sadd.s32 %s560, 1
          $region74: #{tpu_custom_call.1} parent=67 // loop_footer_branch
            %559 = sbr.rel target = $region70
          $region75: #{tpu_custom_call.1} parent=67 // loop_exit
            _
        $region68: #{tpu_custom_call.1} parent=51 // pred_fallthru
          _
        %p805 = scmp.eq.s32.totalorder %s39, 1
        // Predicated region
        $region76: #{tpu_custom_call.1} parent=51 // pred_check
          %p806 = pneg %p805
        $region77: #{tpu_custom_call.1} parent=51 // pred_check_branch
          %808 = sbr.rel (%p806) target = $region79
        $region78: #{tpu_custom_call.1} parent=51 // pred_region
          %v809 = vld [vmem:[#allocation3] sm:$0xff]
          %810 = vst [vmem:[#allocation11] sm:$0xff] %v809
          %v811 = vpack.c.bf16 %v809, %v809
          %v812 = vld [vmem:[#allocation9] sm:$0xf]
          %v813 = vld [vmem:[#allocation9 + $0x4] sm:$0xf]
          %v814 = vld [vmem:[#allocation9 + $0x8] sm:$0xf]
          %v815 = vld [vmem:[#allocation9 + $0xc] sm:$0xf]
          %v816 = vld [vmem:[#allocation9 + $0x10] sm:$0xf]
          %v817 = vld [vmem:[#allocation9 + $0x14] sm:$0xf]
          %v818 = vld [vmem:[#allocation9 + $0x18] sm:$0xf]
          %v819 = vld [vmem:[#allocation9 + $0x1c] sm:$0xf]
          %v820 = vld [vmem:[#allocation9 + $0x20] sm:$0xf]
          %v821 = vld [vmem:[#allocation9 + $0x24] sm:$0xf]
          %v822 = vld [vmem:[#allocation9 + $0x28] sm:$0xf]
          %v823 = vld [vmem:[#allocation9 + $0x2c] sm:$0xf]
          %v824 = vld [vmem:[#allocation9 + $0x30] sm:$0xf]
          %v825 = vld [vmem:[#allocation9 + $0x34] sm:$0xf]
          %v826 = vld [vmem:[#allocation9 + $0x38] sm:$0xf]
          %v827 = vld [vmem:[#allocation9 + $0x3c] sm:$0xf]
          %v828 = vld [vmem:[%s8] sm:$0x1]
          %v830 = vperm.slane %v828, 0
          %v848 = vunpack.c.l.b16 %v812
          %v849 = vunpack.c.l.b16 %v813
          %v850 = vunpack.c.l.b16 %v814
          %v851 = vunpack.c.l.b16 %v815
          %v852 = vunpack.c.l.b16 %v816
          %v853 = vunpack.c.l.b16 %v817
          %v854 = vunpack.c.l.b16 %v818
          %v855 = vunpack.c.l.b16 %v819
          %v856 = vunpack.c.l.b16 %v820
          %v857 = vunpack.c.l.b16 %v821
          %v858 = vunpack.c.l.b16 %v822
          %v859 = vunpack.c.l.b16 %v823
          %v860 = vunpack.c.l.b16 %v824
          %v861 = vunpack.c.l.b16 %v825
          %v862 = vunpack.c.l.b16 %v826
          %v863 = vunpack.c.l.b16 %v827
          %v864 = vpack.c.b16 %v849, %v848
          %v865 = vpack.c.b16 %v851, %v850
          %v866 = vpack.c.b16 %v853, %v852
          %v867 = vpack.c.b16 %v855, %v854
          %v868 = vpack.c.b16 %v857, %v856
          %v869 = vpack.c.b16 %v859, %v858
          %v870 = vpack.c.b16 %v861, %v860
          %v871 = vpack.c.b16 %v863, %v862
          %880 = vmatpush.bf16.msra.mxu0 %v871
          %881 = vmatpush.bf16.msra.mxu0 %v870
          %882 = vmatpush.bf16.msra.mxu0 %v869
          %883 = vmatpush.bf16.msra.mxu0 %v868
          %884 = vmatpush.bf16.msra.mxu0 %v867
          %885 = vmatpush.bf16.msra.mxu0 %v866
          %886 = vmatpush.bf16.msra.mxu0 %v865
          %887 = vmatpush.bf16.msra.mxu0 %v864
          %888 = vmatmul.bf16.gmra.mxu0 %v811
          %v889 = vpop.f32.mrf.mxu0
          %v890 = vadd.f32 %v830, %v889
          %v891 = vpop.f32.mrf.mxu0
          %892 = vdwg.mxu0
          %v893 = vlaneseq
          %v894 = vand.u32 %v893, 127
          %vm895 = vcmp.lt.s32.totalorder %v894, 3
          %v896 = vsel %vm895, %v890, -1e+30
          %897 = vmax.xlane.f32.xlu0 %v896
          %v898 = vpop.xlane.xlu0 %897
          %v899 = vsub.f32 %v896, %v898
          %v900 = vmul.f32 %v899, 1.442695
          %v901 = vpow.pop %v900
          %902 = vadd.xlane.f32.xlu0 %v901
          %v903 = vpop.xlane.xlu0 %902
          %v904 = vlog2.pop %v903
          %v905 = vmul.f32 %v904, 0.6931472
          %v906 = vadd.f32 %v905, %v898
          %v907 = vsub.f32 %v896, %v906
          %908 = vst [vmem:[#allocation12] sm:$0xff] %v907
        $region79: #{tpu_custom_call.1} parent=51 // pred_fallthru
          _
        // Predicated region
        $region80: #{tpu_custom_call.1} parent=51 // pred_check
          %p909 = pneg %p246
        $region81: #{tpu_custom_call.1} parent=51 // pred_check_branch
          %911 = sbr.rel (%p909) target = $region83
        $region82: #{tpu_custom_call.1} parent=51 // pred_region
          %913 = vsyncadd [#allocation8], 0
          %s914 = smul.addr %s38, 8
          %s915 = scalar_lea.hbm %s9, %s914
          %s917 = sshll.u32 [#allocation11], 4
          %s918 = int_to_ptr.vmem [resolvable:$true] %s917
          %s919 = sshll.u32 %s915, 4
          %s920 = int_to_ptr.hbm [resolvable:$true] %s919
          %922 = dma.vmem_to_hbm [thread:$0]  %s918, 128, %s920, [#allocation8]
        $region83: #{tpu_custom_call.1} parent=51 // pred_fallthru
          _
        // Predicated region
        $region84: #{tpu_custom_call.1} parent=51 // pred_check
          %p923 = pneg %p272
        $region85: #{tpu_custom_call.1} parent=51 // pred_check_branch
          %925 = sbr.rel (%p923) target = $region87
        $region86: #{tpu_custom_call.1} parent=51 // pred_region
          %927 = vsyncadd [#allocation13], 0
          %s928 = smul.addr %s38, 8
          %s929 = scalar_lea.hbm %s10, %s928
          %s931 = sshll.u32 [#allocation12], 4
          %s932 = int_to_ptr.vmem [resolvable:$true] %s931
          %s933 = sshll.u32 %s929, 4
          %s934 = int_to_ptr.hbm [resolvable:$true] %s933
          %936 = dma.vmem_to_hbm [thread:$0]  %s932, 128, %s934, [#allocation13]
        $region87: #{tpu_custom_call.1} parent=51 // pred_fallthru
          _
        // Predicated region
        $region88: #{tpu_custom_call.1} parent=51 // pred_check
          %p937 = pneg %p246
        $region89: #{tpu_custom_call.1} parent=51 // pred_check_branch
          %939 = sbr.rel (%p937) target = $region91
        $region90: #{tpu_custom_call.1} parent=51 // pred_region
          %941 = dma.done [#allocation8], 128
        $region91: #{tpu_custom_call.1} parent=51 // pred_fallthru
          _
        // Predicated region
        $region92: #{tpu_custom_call.1} parent=51 // pred_check
          %p942 = pneg %p272
        $region93: #{tpu_custom_call.1} parent=51 // pred_check_branch
          %944 = sbr.rel (%p942) target = $region95
        $region94: #{tpu_custom_call.1} parent=51 // pred_region
          %946 = dma.done [#allocation13], 128
        $region95: #{tpu_custom_call.1} parent=51 // pred_fallthru
          _
      $region52: #{tpu_custom_call.1} parent=5 // pred_fallthru
        _
      %p947 = scmp.le.s32.totalorder 2, %s29
      // Predicated region
      $region96: #{tpu_custom_call.1} parent=5 // pred_check
        %p948 = pneg %p947
      $region97: #{tpu_custom_call.1} parent=5 // pred_check_branch
        %950 = sbr.rel (%p948) target = $region99
      $region98: #{tpu_custom_call.1} parent=5 // pred_region
        %s951 = ssub.s32 %s29, 2
      $region99: #{tpu_custom_call.1} parent=5 // pred_fallthru
        _
    $region6: #{tpu_custom_call.1} parent=1 // loop_footer
      %s33 = sadd.s32 1, %s29
    $region7: #{tpu_custom_call.1} parent=1 // loop_footer_branch
      %28 = sbr.rel target = $region3
    $region8: #{tpu_custom_call.1} parent=1 // loop_exit
      _
    %952 = vsyncpa [#allocation7], 1
    %s953 = scalar_lea.sflag [#allocation7], 1
    %954 = vsyncpa %s953, 1
    %955 = vsyncpa [#allocation10], 1
    %956 = vsyncpa [#allocation8], 1
    %s957 = scalar_lea.sflag [#allocation8], 1
    %958 = vsyncpa %s957, 1
    %959 = vsyncpa [#allocation13], 1

</llo_original>
